<compile_context>
chip_gen: v7x
topology: tpu7x:2x2x1
jax: 0.10.0
libtpu: 0.0.40
codegen_flags: <defaults>
</compile_context>

<pallas_src>
import jax
import jax.numpy as jnp
from jax import lax
from jax.experimental import pallas as pl
from jax.experimental.pallas import tpu as pltpu


def _round_up(x, m):
    return ((x + m - 1) // m) * m


def _propagation_matrix_kernel(e_ref, w_ref, c_ref):
    """C = softmax(E @ E^T, axis=-1) @ W^T, all in f32, no explicit transposes."""
    e = e_ref[...]
    # logits[i, j] = sum_h E[i, h] * E[j, h]   (contract last axis of both operands)
    logits = lax.dot_general(
        e, e,
        dimension_numbers=(((1,), (1,)), ((), ())),
        preferred_element_type=jnp.float32,
    )                                                           # (N, N) f32
    m = jnp.max(logits, axis=-1, keepdims=True)
    p = jnp.exp(logits - m)
    a = p * pl.reciprocal(jnp.sum(p, axis=-1, keepdims=True), approx=False)
    # C[i, j] = sum_k A[i, k] * W[j, k]  ==  (A @ W^T)[i, j]
    c_ref[...] = lax.dot_general(
        a, w_ref[...],
        dimension_numbers=(((1,), (1,)), ((), ())),
        preferred_element_type=jnp.float32,
    )


def _apply_kernel(z_ref, c_ref, b_ref, o_ref):
    """out_block = z_block @ C_hat + b_hat (f32 accumulate, single output cast)."""
    acc = jnp.dot(z_ref[...], c_ref[...], preferred_element_type=jnp.float32)
    o_ref[...] = (acc + b_ref[...]).astype(o_ref.dtype)


def gcn_forward(z_delta, embedding, w_weight, w_bias, *, block_rows=None,
                target_block_bytes=2 * 1024 * 1024):
    """Pallas implementation of GraphConvolutionalNetwork.forward.

    z_delta  : any shape whose last dim is num_nodes (reshaped to (-1, N))
    embedding: (num_nodes, hidden_dim)
    w_weight : (num_nodes, num_nodes)   PyTorch Linear weight (out, in)
    w_bias   : (num_nodes,)
    returns  : (M, num_nodes) with M = z_delta.size // num_nodes
    """
    num_nodes, hidden_dim = embedding.shape
    z2d = z_delta.reshape(-1, num_nodes)
    m = z2d.shape[0]

    # ---- Kernel 1: fused propagation matrix C (tiny, ungridded, computed once). ----
    c = pl.pallas_call(
        _propagation_matrix_kernel,
        out_shape=jax.ShapeDtypeStruct((num_nodes, num_nodes), jnp.float32),
        in_specs=[
            pl.BlockSpec(memory_space=pltpu.VMEM),   # E (N, H)
            pl.BlockSpec(memory_space=pltpu.VMEM),   # W (N, N)
        ],
        out_specs=pl.BlockSpec(memory_space=pltpu.VMEM),
        cost_estimate=pl.CostEstimate(
            flops=2 * num_nodes * num_nodes * (hidden_dim + num_nodes),
            transcendentals=num_nodes * num_nodes,
            bytes_accessed=4 * (num_nodes * hidden_dim + 2 * num_nodes * num_nodes),
        ),
    )(embedding, w_weight)

    # ---- Lane-dense repack: (M, N) -> (M/pack, pack*N) with block-diagonal C. ----
    pack = 128 // num_nodes if (num_nodes <= 128 and 128 % num_nodes == 0) else 1
    if pack > 1 and m % pack != 0:
        pack = 1                                   # unpacked fallback, no padding copies
    p_width = pack * num_nodes
    mp = m // pack
    z_packed = z2d.reshape(mp, p_width)            # free row-major reshape

    if pack > 1:
        # blockdiag(C, ..., C): out.reshape(mp, p_width) == z_packed @ C_hat
        c_hat = jnp.kron(jnp.eye(pack, dtype=jnp.float32), c)            # (p, p)
        bias_hat = jnp.tile(w_bias.astype(jnp.float32), pack).reshape(1, p_width)
    else:
        c_hat = c
        bias_hat = w_bias.astype(jnp.float32).reshape(1, p_width)

    # ---- Row-tile selection from a VMEM budget (no jnp.pad, ragged tail clamped). ----
    itemsize = jnp.dtype(z_packed.dtype).itemsize
    if block_rows is None:
        cap = max(8, (target_block_bytes // (p_width * itemsize)) // 8 * 8)
    else:
        cap = max(8, _round_up(int(block_rows), 8))
    if mp <= cap:
        tm = mp                                    # single block == full array dims
    else:
        steps = pl.cdiv(mp, cap)                   # >= 2 grid steps (megacore on v7x)
        tm = _round_up(pl.cdiv(mp, steps), 8)
    grid = (pl.cdiv(mp, tm),)

    # ---- Kernel 2: out = z_packed @ C_hat + b_hat, gridded + pipelined over rows. ----
    out_packed = pl.pallas_call(
        _apply_kernel,
        out_shape=jax.ShapeDtypeStruct((mp, p_width), z_packed.dtype),
        grid_spec=pltpu.PrefetchScalarGridSpec(
            num_scalar_prefetch=0,
            grid=grid,
            in_specs=[
                pl.BlockSpec((tm, p_width), lambda i: (i, 0)),           # z rows
                pl.BlockSpec((p_width, p_width), lambda i: (0, 0)),      # C_hat (resident)
                pl.BlockSpec((1, p_width), lambda i: (0, 0)),            # bias (resident)
            ],
            out_specs=pl.BlockSpec((tm, p_width), lambda i: (i, 0)),
        ),
        compiler_params=pltpu.CompilerParams(
            dimension_semantics=("parallel",),
        ),
        cost_estimate=pl.CostEstimate(
            flops=2 * grid[0] * tm * p_width * p_width,
            transcendentals=0,
            bytes_accessed=itemsize * 2 * mp * p_width + 4 * p_width * p_width,
        ),
    )(z_packed, c_hat, bias_hat)

    return out_packed.reshape(m, num_nodes)


def gcn_reference(z_delta, embedding, w_weight, w_bias):
    num_nodes = embedding.shape[0]
    z2d = z_delta.reshape(-1, num_nodes).astype(jnp.float32)
    a = jax.nn.softmax(embedding @ embedding.T, axis=-1)
    z = z2d @ a
    return z @ w_weight.T + w_bias[None, :]


if __name__ == "__main__":
    # Shapes consistent with the module: num_nodes=16, hidden_dim=32.
    num_nodes = 16
    hidden_dim = 32

    key = jax.random.PRNGKey(0)
    k_e, k_w, k_b, k_z, k_z2, k_z3 = jax.random.split(key, 6)

    # Deterministic synthetic parameters (shapes from __init__).
    embedding = jax.random.normal(k_e, (num_nodes, hidden_dim), dtype=jnp.float32)
    # nn.Linear(num_nodes, num_nodes): weight (N, N), bias (N,)
    bound = 1.0 / (num_nodes ** 0.5)
    w_weight = jax.random.uniform(k_w, (num_nodes, num_nodes),
                                  minval=-bound, maxval=bound, dtype=jnp.float32)
    w_bias = jax.random.uniform(k_b, (num_nodes,),
                                minval=-bound, maxval=bound, dtype=jnp.float32)

    def check(z, **kw):
        out = jax.block_until_ready(gcn_forward(z, embedding, w_weight, w_bias, **kw))
        ref = gcn_reference(z, embedding, w_weight, w_bias)
        assert out.shape == ref.shape, (out.shape, ref.shape)
        assert jnp.allclose(out, ref, atol=1e-4, rtol=1e-4), (
            f"max abs err = {jnp.max(jnp.abs(out - ref))}"
        )
        return out

    # Small case: (2, 4, 16) -> M=8 -> one packed (1, 128) row block.
    z_small = jax.random.normal(k_z, (2, 4, num_nodes), dtype=jnp.float32)
    out_small = check(z_small)
    assert out_small.shape == (8, num_nodes)

    # Larger case: M=600 -> 75 packed rows, single block, lane-dense path.
    z_big = jax.random.normal(k_z2, (3, 200, num_nodes), dtype=jnp.float32)
    out_big = check(z_big)
    assert out_big.shape == (600, num_nodes)

    # Multi-block + ragged last block (forced small tile): 75 packed rows,
    # 5 grid steps of 16 rows, last block clamped to 11 valid rows.
    check(z_big, block_rows=16)

    # Unpacked fallback: M=65 is not a multiple of the pack factor.
    z_odd = jax.random.normal(k_z3, (5, 13, num_nodes), dtype=jnp.float32)
    out_odd = check(z_odd)
    assert out_odd.shape == (65, num_nodes)

    print("KERNEL_OK")
</pallas_src>

<mosaic_0001>
module attributes {stable_mosaic.version = 11 : i64} {
  func.func @_propagation_matrix_kernel(%arg0: memref<16x32xf32, #tpu.memory_space<vmem>>, %arg1: memref<16x16xf32, #tpu.memory_space<vmem>>, %arg2: memref<16x16xf32, #tpu.memory_space<vmem>>) attributes {dimension_semantics = [], scalar_prefetch = 0 : i64, scratch_operands = 0 : i64, tpu.core_type = #tpu.core_type<tc>} {
    %c0 = arith.constant 0 : index
    %c0_0 = arith.constant 0 : index
    %0 = vector.load %arg0[%c0, %c0_0] : memref<16x32xf32, #tpu.memory_space<vmem>>, vector<16x32xf32>
    %cst = arith.constant dense<0.000000e+00> : vector<16x16xf32>
    %1 = tpu.matmul %0, %0, %cst {dimension_numbers = #tpu.dot_dimension_numbers<[1], [1], [0], [0], [0, 0, 1, 0], [], []>} : vector<16x32xf32>, vector<16x32xf32>, vector<16x16xf32> -> vector<16x16xf32>
    %cst_1 = arith.constant dense<0xFF800000> : vector<16xf32>
    %2 = vector.multi_reduction <maximumf>, %1, %cst_1 [1] : vector<16x16xf32> to vector<16xf32>
    %3 = vector.shape_cast %2 : vector<16xf32> to vector<16x1xf32>
    %4 = vector.broadcast %3 : vector<16x1xf32> to vector<16x16xf32>
    %5 = arith.subf %1, %4 : vector<16x16xf32>
    %6 = math.exp %5 : vector<16x16xf32>
    %cst_2 = arith.constant dense<0.000000e+00> : vector<16xf32>
    %7 = vector.multi_reduction <add>, %6, %cst_2 [1] : vector<16x16xf32> to vector<16xf32>
    %8 = vector.shape_cast %7 : vector<16xf32> to vector<16x1xf32>
    %9 = tpu.reciprocal %8 : vector<16x1xf32> -> vector<16x1xf32>
    %10 = vector.broadcast %9 : vector<16x1xf32> to vector<16x16xf32>
    %11 = arith.mulf %6, %10 : vector<16x16xf32>
    %c0_3 = arith.constant 0 : index
    %c0_4 = arith.constant 0 : index
    %12 = vector.load %arg1[%c0_3, %c0_4] : memref<16x16xf32, #tpu.memory_space<vmem>>, vector<16x16xf32>
    %cst_5 = arith.constant dense<0.000000e+00> : vector<16x16xf32>
    %13 = tpu.matmul %11, %12, %cst_5 {dimension_numbers = #tpu.dot_dimension_numbers<[1], [1], [0], [0], [0, 0, 1, 0], [], []>} : vector<16x16xf32>, vector<16x16xf32>, vector<16x16xf32> -> vector<16x16xf32>
    %c0_6 = arith.constant 0 : index
    %c0_7 = arith.constant 0 : index
    %14 = vector.load %arg2[%c0_6, %c0_7] : memref<16x16xf32, #tpu.memory_space<vmem>>, vector<16x16xf32>
    tpu.vector_store %arg2[%c0_6, %c0_7], %13 {strides = array<i32>} : memref<16x16xf32, #tpu.memory_space<vmem>>, vector<16x16xf32>,
    return
  }
}

</mosaic_0001>

<llo_original>
// kernel: tpu_custom_call.1
$region0: #{tpu_custom_call.1}
  #allocation0 [shape = 'u32[]', space=smem, size = 0x4, offset = 0x4, fixed_abs, tag = 'smem constant byte address 0x4 - core index']
  #allocation1 [shape = 'u32[144,128]{1,0:T(1,128)}', space=vmem, size = 0x12000, scoped, tag = 'internal scratch']
  %s0 = inlined_call_operand.hbm [shape: f32[16,32], index: 0, kind: input, shape index: {}]
  %s1 = inlined_call_operand.hbm [shape: f32[16,16], index: 1, kind: input, shape index: {}]
  %s2 = inlined_call_operand.hbm [shape: f32[16,16], index: 2, kind: output, shape index: {}]
  %s3 = sld [smem:[#allocation0]]
  $region26: #{tpu_custom_call.1} parent=0
    _
  %s5 = ssub.s32 1, %s3
  %s6 = scalar_select 0, %s5, %s3
  $region1: #{tpu_custom_call.1} parent=0
    #allocation2 [shape = 'u8[8192]{0}', space=vmem, size = 0x2000, scoped, tag = 'input window, operand 0, single buffered']
    #allocation3 [shape = 's32[1]{0}', space=sflag, size = 0x4, scoped, tag = 'scoped memory for tpu_custom_call.1']
    #allocation4 [shape = 's32[1]{0}', space=sflag, size = 0x4, scoped, tag = 'scoped memory for tpu_custom_call.1']
    #allocation5 [shape = 'u8[8192]{0}', space=vmem, size = 0x2000, scoped, tag = 'input window, operand 1, single buffered']
    #allocation6 [shape = 's32[1]{0}', space=sflag, size = 0x4, scoped, tag = 'scoped memory for tpu_custom_call.1']
    #allocation7 [shape = 'u8[8192]{0}', space=vmem, size = 0x2000, scoped, tag = 'output window, operand 0, single buffered']
    %7 = vsyncpa [#allocation3], 0
    %8 = vsyncpa [#allocation6], 0
    %9 = vsyncpa [#allocation4], 0
    // Predicated region
    $region2: #{tpu_custom_call.1} parent=1 // pred_check
      _
    $region3: #{tpu_custom_call.1} parent=1 // pred_check_branch
      %11 = sbr.rel (0) target = $region5
    $region4: #{tpu_custom_call.1} parent=1 // pred_region
      %s13 = ssub.s32 256, 256
      %14 = vsyncadd [#allocation3], %s13
      %s15 = sshll.u32 [#allocation2], 4
      %s16 = int_to_ptr.vmem [resolvable:$true] %s15
      %21 = dma.hbm_to_vmem [thread:$0]  %s0, 256, %s16, [#allocation3], 128, 128, 8
    $region5: #{tpu_custom_call.1} parent=1 // pred_fallthru
      _
    // Predicated region
    $region6: #{tpu_custom_call.1} parent=1 // pred_check
      _
    $region7: #{tpu_custom_call.1} parent=1 // pred_check_branch
      %23 = sbr.rel (0) target = $region9
    $region8: #{tpu_custom_call.1} parent=1 // pred_region
      %s25 = ssub.s32 256, 256
      %26 = vsyncadd [#allocation6], %s25
      %s27 = sshll.u32 [#allocation5], 4
      %s28 = int_to_ptr.vmem [resolvable:$true] %s27
      %33 = dma.hbm_to_vmem [thread:$0]  %s1, 256, %s28, [#allocation6], 128, 128, 8
    $region9: #{tpu_custom_call.1} parent=1 // pred_fallthru
      _
    // Predicated region
    $region10: #{tpu_custom_call.1} parent=1 // pred_check
      _
    $region11: #{tpu_custom_call.1} parent=1 // pred_check_branch
      %35 = sbr.rel (0) target = $region13
    $region12: #{tpu_custom_call.1} parent=1 // pred_region
      %36 = dma.done [#allocation3], 256
    $region13: #{tpu_custom_call.1} parent=1 // pred_fallthru
      _
    // Predicated region
    $region14: #{tpu_custom_call.1} parent=1 // pred_check
      _
    $region15: #{tpu_custom_call.1} parent=1 // pred_check_branch
      %38 = sbr.rel (0) target = $region17
    $region16: #{tpu_custom_call.1} parent=1 // pred_region
      %39 = dma.done [#allocation6], 256
    $region17: #{tpu_custom_call.1} parent=1 // pred_fallthru
      _
    %v40 = vld [vmem:[#allocation2] sm:$0xff]
    %v41 = vld [vmem:[#allocation2 + $0x8] sm:$0xff]
    %vm42 = vcmask 261120
    %v44 = vsel %vm42, %v40, 0
    %v47 = vsel %vm42, %v41, 0
    %49 = vmatprep.subr.mxu0 0.0
    %50 = vmatpush1.xpose.msra.mxu0 %v44
    %51 = vmatprep.subr.mxu0 0.0
    %52 = vmatpush1.xpose.msra.mxu0 %v47
    %53 = vmatprep.subr.mxu0 0.0
    %54 = vmatpush1.xpose.msra.mxu0 0.0
    %55 = vmatprep.subr.mxu0 0.0
    %56 = vmatpush1.xpose.msra.mxu0 0.0
    %57 = vmatprep.subr.mxu0 0.0
    %58 = vmatpush1.xpose.msra.mxu0 0.0
    %59 = vmatprep.subr.mxu0 0.0
    %60 = vmatpush1.xpose.msra.mxu0 0.0
    %61 = vmatprep.subr.mxu0 0.0
    %62 = vmatpush1.xpose.msra.mxu0 0.0
    %63 = vmatprep.subr.mxu0 0.0
    %64 = vmatpush1.xpose.msra.mxu0 0.0
    %65 = vmatprep.subr.mxu0 0.0
    %66 = vmatpush1.xpose.msra.mxu0 0.0
    %67 = vmatprep.subr.mxu0 0.0
    %68 = vmatpush1.xpose.msra.mxu0 0.0
    %69 = vmatprep.subr.mxu0 0.0
    %70 = vmatpush1.xpose.msra.mxu0 0.0
    %71 = vmatprep.subr.mxu0 0.0
    %72 = vmatpush1.xpose.msra.mxu0 0.0
    %73 = vmatprep.subr.mxu0 0.0
    %74 = vmatpush1.xpose.msra.mxu0 0.0
    %75 = vmatprep.subr.mxu0 0.0
    %76 = vmatpush1.xpose.msra.mxu0 0.0
    %77 = vmatprep.subr.mxu0 0.0
    %78 = vmatpush1.xpose.msra.mxu0 0.0
    %79 = vmatprep.subr.mxu0 0.0
    %80 = vmatpush1.xpose.msra.mxu0 0.0
    %81 = vmatprep.subr.mxu0 0.0
    %82 = vmatpush1.xpose.msra.mxu0 0.0
    %83 = vmatprep.subr.mxu0 0.0
    %84 = vmatpush1.xpose.msra.mxu0 0.0
    %85 = vmatprep.subr.mxu0 0.0
    %86 = vmatpush1.xpose.msra.mxu0 0.0
    %87 = vmatprep.subr.mxu0 0.0
    %88 = vmatpush1.xpose.msra.mxu0 0.0
    %89 = vmatprep.subr.mxu0 0.0
    %90 = vmatpush1.xpose.msra.mxu0 0.0
    %91 = vmatprep.subr.mxu0 0.0
    %92 = vmatpush1.xpose.msra.mxu0 0.0
    %93 = vmatprep.subr.mxu0 0.0
    %94 = vmatpush1.xpose.msra.mxu0 0.0
    %95 = vmatprep.subr.mxu0 0.0
    %96 = vmatpush1.xpose.msra.mxu0 0.0
    %97 = vmatprep.subr.mxu0 0.0
    %98 = vmatpush1.xpose.msra.mxu0 0.0
    %99 = vmatprep.subr.mxu0 0.0
    %100 = vmatpush1.xpose.msra.mxu0 0.0
    %101 = vmatprep.subr.mxu0 0.0
    %102 = vmatpush1.xpose.msra.mxu0 0.0
    %103 = vmatprep.subr.mxu0 0.0
    %104 = vmatpush1.xpose.msra.mxu0 0.0
    %105 = vmatprep.subr.mxu0 0.0
    %106 = vmatpush1.xpose.msra.mxu0 0.0
    %107 = vmatprep.subr.mxu0 0.0
    %108 = vmatpush1.xpose.msra.mxu0 0.0
    %109 = vmatprep.subr.mxu0 0.0
    %110 = vmatpush1.xpose.msra.mxu0 0.0
    %111 = vmatprep.subr.mxu0 0.0
    %112 = vmatpush1.xpose.msra.mxu0 0.0
    %113 = vmatprep.mubr.f32.mxu0 0.0
    %114 = vmatmul.mubr.f32.gmra.mrb[0].mxu0 %v44
    %v115 = vpop.f32.mrb[0].mxu0
    %v116 = vadd.f32 0.0, %v115
    %v117 = vpop.f32.mrb[0].mxu0
    %118 = vmatprep.mubr.f32.mxu0 0.0
    %119 = vmatmul.mubr.f32.gmra.mrb[0].mxu0 %v47
    %v120 = vpop.f32.mrb[0].mxu0
    %v121 = vadd.f32 0.0, %v120
    %v122 = vpop.f32.mrb[0].mxu0
    %123 = vdwg.mxu0
    %vm124 = vcmask 130048
    %v125 = vsel %vm124, %v116, -inf
    %126 = vmax.xlane.f32.xlu0 %v125
    %v127 = vpop.xlane.xlu0 %126
    %v128 = vsel %vm124, %v121, -inf
    %129 = vmax.xlane.f32.xlu0 %v128
    %v130 = vpop.xlane.xlu0 %129
    %v131 = vsub.f32 %v116, %v127
    %v132 = vsub.f32 %v121, %v130
    %v133 = vmul.f32 %v131, 1.442695
    %v134 = vpow.pop %v133
    %v135 = vmul.f32 %v132, 1.442695
    %v136 = vpow.pop %v135
    %v137 = vsel %vm124, %v134, 0.0
    %138 = vadd.xlane.f32.xlu0 %v137
    %v139 = vpop.xlane.xlu0 %138
    %v140 = vsel %vm124, %v136, 0.0
    %141 = vadd.xlane.f32.xlu0 %v140
    %v142 = vpop.xlane.xlu0 %141
    %v143 = vrcp.pop %v139
    %v144 = vrcp.pop %v142
    %v145 = vmul.f32 %v134, %v143
    %v146 = vmul.f32 %v136, %v144
    %v147 = vld [vmem:[#allocation5] sm:$0xff]
    %v148 = vld [vmem:[#allocation5 + $0x8] sm:$0xff]
    %v150 = vsel %vm124, %v145, 0
    %v153 = vsel %vm124, %v146, 0
    %v156 = vsel %vm124, %v147, 0
    %v159 = vsel %vm124, %v148, 0
    %161 = vmatprep.subr.mxu0 0.0
    %162 = vmatpush1.xpose.msra.mxu0 %v156
    %163 = vmatprep.subr.mxu0 0.0
    %164 = vmatpush1.xpose.msra.mxu0 %v159
    %165 = vmatprep.subr.mxu0 0.0
    %166 = vmatpush1.xpose.msra.mxu0 0.0
    %167 = vmatprep.subr.mxu0 0.0
    %168 = vmatpush1.xpose.msra.mxu0 0.0
    %169 = vmatprep.subr.mxu0 0.0
    %170 = vmatpush1.xpose.msra.mxu0 0.0
    %171 = vmatprep.subr.mxu0 0.0
    %172 = vmatpush1.xpose.msra.mxu0 0.0
    %173 = vmatprep.subr.mxu0 0.0
    %174 = vmatpush1.xpose.msra.mxu0 0.0
    %175 = vmatprep.subr.mxu0 0.0
    %176 = vmatpush1.xpose.msra.mxu0 0.0
    %177 = vmatprep.subr.mxu0 0.0
    %178 = vmatpush1.xpose.msra.mxu0 0.0
    %179 = vmatprep.subr.mxu0 0.0
    %180 = vmatpush1.xpose.msra.mxu0 0.0
    %181 = vmatprep.subr.mxu0 0.0
    %182 = vmatpush1.xpose.msra.mxu0 0.0
    %183 = vmatprep.subr.mxu0 0.0
    %184 = vmatpush1.xpose.msra.mxu0 0.0
    %185 = vmatprep.subr.mxu0 0.0
    %186 = vmatpush1.xpose.msra.mxu0 0.0
    %187 = vmatprep.subr.mxu0 0.0
    %188 = vmatpush1.xpose.msra.mxu0 0.0
    %189 = vmatprep.subr.mxu0 0.0
    %190 = vmatpush1.xpose.msra.mxu0 0.0
    %191 = vmatprep.subr.mxu0 0.0
    %192 = vmatpush1.xpose.msra.mxu0 0.0
    %193 = vmatprep.subr.mxu0 0.0
    %194 = vmatpush1.xpose.msra.mxu0 0.0
    %195 = vmatprep.subr.mxu0 0.0
    %196 = vmatpush1.xpose.msra.mxu0 0.0
    %197 = vmatprep.subr.mxu0 0.0
    %198 = vmatpush1.xpose.msra.mxu0 0.0
    %199 = vmatprep.subr.mxu0 0.0
    %200 = vmatpush1.xpose.msra.mxu0 0.0
    %201 = vmatprep.subr.mxu0 0.0
    %202 = vmatpush1.xpose.msra.mxu0 0.0
    %203 = vmatprep.subr.mxu0 0.0
    %204 = vmatpush1.xpose.msra.mxu0 0.0
    %205 = vmatprep.subr.mxu0 0.0
    %206 = vmatpush1.xpose.msra.mxu0 0.0
    %207 = vmatprep.subr.mxu0 0.0
    %208 = vmatpush1.xpose.msra.mxu0 0.0
    %209 = vmatprep.subr.mxu0 0.0
    %210 = vmatpush1.xpose.msra.mxu0 0.0
    %211 = vmatprep.subr.mxu0 0.0
    %212 = vmatpush1.xpose.msra.mxu0 0.0
    %213 = vmatprep.subr.mxu0 0.0
    %214 = vmatpush1.xpose.msra.mxu0 0.0
    %215 = vmatprep.subr.mxu0 0.0
    %216 = vmatpush1.xpose.msra.mxu0 0.0
    %217 = vmatprep.subr.mxu0 0.0
    %218 = vmatpush1.xpose.msra.mxu0 0.0
    %219 = vmatprep.subr.mxu0 0.0
    %220 = vmatpush1.xpose.msra.mxu0 0.0
    %221 = vmatprep.subr.mxu0 0.0
    %222 = vmatpush1.xpose.msra.mxu0 0.0
    %223 = vmatprep.subr.mxu0 0.0
    %224 = vmatpush1.xpose.msra.mxu0 0.0
    %225 = vmatprep.mubr.f32.mxu0 0.0
    %226 = vmatmul.mubr.f32.gmra.mrb[0].mxu0 %v150
    %v227 = vpop.f32.mrb[0].mxu0
    %v228 = vadd.f32 0.0, %v227
    %v229 = vpop.f32.mrb[0].mxu0
    %230 = vmatprep.mubr.f32.mxu0 0.0
    %231 = vmatmul.mubr.f32.gmra.mrb[0].mxu0 %v153
    %v232 = vpop.f32.mrb[0].mxu0
    %v233 = vadd.f32 0.0, %v232
    %v234 = vpop.f32.mrb[0].mxu0
    %235 = vdwg.mxu0
    %236 = vst.msk [vmem:[#allocation7] sm:$0xff] %vm124, %v228
    %237 = vst.msk [vmem:[#allocation7 + $0x8] sm:$0xff] %vm124, %v233
    // Predicated region
    $region18: #{tpu_custom_call.1} parent=1 // pred_check
      _
    $region19: #{tpu_custom_call.1} parent=1 // pred_check_branch
      %239 = sbr.rel (0) target = $region21
    $region20: #{tpu_custom_call.1} parent=1 // pred_region
      %s241 = ssub.s32 256, 256
      %242 = vsyncadd [#allocation4], %s241
      %s243 = sshll.u32 [#allocation7], 4
      %s244 = int_to_ptr.vmem [resolvable:$true] %s243
      %249 = dma.vmem_to_hbm [thread:$0]  %s244, 256, %s2, [#allocation4], 128, 128, 8
    $region21: #{tpu_custom_call.1} parent=1 // pred_fallthru
      _
    // Predicated region
    $region22: #{tpu_custom_call.1} parent=1 // pred_check
      _
    $region23: #{tpu_custom_call.1} parent=1 // pred_check_branch
      %251 = sbr.rel (0) target = $region25
    $region24: #{tpu_custom_call.1} parent=1 // pred_region
      %252 = dma.done [#allocation4], 256
    $region25: #{tpu_custom_call.1} parent=1 // pred_fallthru
      _
    %253 = vsyncpa [#allocation3], 1
    %254 = vsyncpa [#allocation6], 1
    %255 = vsyncpa [#allocation4], 1

</llo_original>
